<compile_context>
chip_gen: v6e
topology: v6e:2x2x1
jax: 0.10.0
libtpu: 0.0.40
codegen_flags: <defaults>
</compile_context>

<pallas_src>
import jax
import jax.numpy as jnp
from jax.experimental import pallas as pl
from jax.experimental.pallas import tpu as pltpu

# vocab sizes mirror nn.Embedding(8, H), (32, H), (367, H), (4, H)
VOCABS = (8, 32, 367, 4)


def _cer_kernel(idx_ref, w_dow_ref, w_dom_ref, w_doy_ref, w_fest_ref, out_ref):
    # idx_ref : SMEM (N*4,) int32   (scalar prefetch)
    # tables  : VMEM full-extent (vocab, H) f32
    # out_ref : VMEM (N, H) f32
    n_tok = out_ref.shape[0]
    # N is tiny (B*S = 14) -> fully unrolled static loop; only the table row
    # starts are dynamic (cheap SMEM scalar reads), everything else is static.
    for t in range(n_tok):
        i0 = idx_ref[4 * t + 0]
        i1 = idx_ref[4 * t + 1]
        i2 = idx_ref[4 * t + 2]
        i3 = idx_ref[4 * t + 3]
        r01 = w_dow_ref[pl.ds(i0, 1), :] + w_dom_ref[pl.ds(i1, 1), :]
        r23 = w_doy_ref[pl.ds(i2, 1), :] + w_fest_ref[pl.ds(i3, 1), :]
        out_ref[pl.ds(t, 1), :] = r01 + r23  # (1, H) f32, exact gather+sum


def categorical_event_representation(inputs_festival, w_dow, w_dom, w_doy, w_fest):
    """inputs_festival: (B, S, 4) int32 categorical indices.
    Returns (B, S, 1, H) float32, matching the PyTorch module forward."""
    B, S, F = inputs_festival.shape
    H = w_dow.shape[1]
    N = B * S

    # Flatten indices to 1-D for minimal SMEM padding.
    idx_flat = inputs_festival.reshape(N * F).astype(jnp.int32)

    out = pl.pallas_call(
        _cer_kernel,
        out_shape=jax.ShapeDtypeStruct((N, H), jnp.float32),
        grid_spec=pltpu.PrefetchScalarGridSpec(
            num_scalar_prefetch=1,            # idx_flat -> SMEM, first kernel arg
            grid=(1,),                        # whole problem is one tile
            in_specs=[
                # full-extent table blocks (tables total ~53 KB << VMEM)
                pl.BlockSpec((VOCABS[0], H), lambda i, idx: (0, 0)),   # day_of_week
                pl.BlockSpec((VOCABS[1], H), lambda i, idx: (0, 0)),   # day_of_month
                pl.BlockSpec((VOCABS[2], H), lambda i, idx: (0, 0)),   # day_of_year
                pl.BlockSpec((VOCABS[3], H), lambda i, idx: (0, 0)),   # festival_type
            ],
            out_specs=pl.BlockSpec((N, H), lambda i, idx: (0, 0)),
        ),
        compiler_params=pltpu.CompilerParams(
            dimension_semantics=("arbitrary",)),
    )(idx_flat, w_dow, w_dom, w_doy, w_fest)

    # unsqueeze(-2): (N, H) -> (B, S, 1, H)
    return out.reshape(B, S, 1, H)


def _reference(inputs_festival, w_dow, w_dom, w_doy, w_fest):
    emb = (w_dow[inputs_festival[:, :, 0]]
           + w_dom[inputs_festival[:, :, 1]]
           + w_doy[inputs_festival[:, :, 2]]
           + w_fest[inputs_festival[:, :, 3]])
    return emb[:, :, None, :]


if __name__ == "__main__":
    key = jax.random.PRNGKey(0)
    B, S, H = 2, 7, 32  # feature_seq_len = 7, hidden_dim = 32

    k_idx0, k_idx1, k_idx2, k_idx3, k0, k1, k2, k3 = jax.random.split(key, 8)

    # deterministic embedding tables ~ N(0, 1) as in nn.Embedding default init
    w_dow  = jax.random.normal(k0, (VOCABS[0], H), dtype=jnp.float32)
    w_dom  = jax.random.normal(k1, (VOCABS[1], H), dtype=jnp.float32)
    w_doy  = jax.random.normal(k2, (VOCABS[2], H), dtype=jnp.float32)
    w_fest = jax.random.normal(k3, (VOCABS[3], H), dtype=jnp.float32)

    # TODO(synk): context_linear and ReLU are declared in __init__ but unused
    # in the reference forward; omitted.

    idx = jnp.stack([
        jax.random.randint(k_idx0, (B, S), 0, VOCABS[0], dtype=jnp.int32),
        jax.random.randint(k_idx1, (B, S), 0, VOCABS[1], dtype=jnp.int32),
        jax.random.randint(k_idx2, (B, S), 0, VOCABS[2], dtype=jnp.int32),
        jax.random.randint(k_idx3, (B, S), 0, VOCABS[3], dtype=jnp.int32),
    ], axis=-1)  # (B, S, 4) int32

    out = categorical_event_representation(idx, w_dow, w_dom, w_doy, w_fest)
    out = jax.block_until_ready(out)

    ref = _reference(idx, w_dow, w_dom, w_doy, w_fest)
    assert out.shape == (B, S, 1, H), out.shape
    # scalar row gathers + f32 adds are bit-exact vs. the reference gather
    assert jnp.allclose(out, ref, atol=1e-6), float(jnp.max(jnp.abs(out - ref)))
    print("KERNEL_OK")
</pallas_src>

<mosaic_0001>
module attributes {stable_mosaic.version = 11 : i64} {
  func.func @_cer_kernel(%arg0: i32, %arg1: memref<56xi32, #tpu.memory_space<smem>>, %arg2: memref<8x32xf32, #tpu.memory_space<vmem>>, %arg3: memref<32x32xf32, #tpu.memory_space<vmem>>, %arg4: memref<367x32xf32, #tpu.memory_space<vmem>>, %arg5: memref<4x32xf32, #tpu.memory_space<vmem>>, %arg6: memref<14x32xf32, #tpu.memory_space<vmem>>) attributes {dimension_semantics = [#tpu.dimension_semantics<arbitrary>], iteration_bounds = array<i64: 1>, scalar_prefetch = 1 : i64, scratch_operands = 0 : i64, tpu.core_type = #tpu.core_type<tc>, window_params = [{pipeline_mode = #tpu.pipeline_mode<synchronous>, transform_indices = @transform_0, window_bounds = array<i64: 8, 32>}, {pipeline_mode = #tpu.pipeline_mode<synchronous>, transform_indices = @transform_1, window_bounds = array<i64: 32, 32>}, {pipeline_mode = #tpu.pipeline_mode<synchronous>, transform_indices = @transform_2, window_bounds = array<i64: 367, 32>}, {pipeline_mode = #tpu.pipeline_mode<synchronous>, transform_indices = @transform_3, window_bounds = array<i64: 4, 32>}, {pipeline_mode = #tpu.pipeline_mode<synchronous>, transform_indices = @transform_4, window_bounds = array<i64: 14, 32>}]} {
    %c0 = arith.constant 0 : index
    %0 = memref.load %arg1[%c0] : memref<56xi32, #tpu.memory_space<smem>>
    %c1 = arith.constant 1 : index
    %1 = memref.load %arg1[%c1] : memref<56xi32, #tpu.memory_space<smem>>
    %c2 = arith.constant 2 : index
    %2 = memref.load %arg1[%c2] : memref<56xi32, #tpu.memory_space<smem>>
    %c3 = arith.constant 3 : index
    %3 = memref.load %arg1[%c3] : memref<56xi32, #tpu.memory_space<smem>>
    %4 = arith.index_cast %0 : i32 to index
    %c0_0 = arith.constant 0 : index
    %5 = vector.load %arg2[%4, %c0_0] : memref<8x32xf32, #tpu.memory_space<vmem>>, vector<1x32xf32>
    %6 = arith.index_cast %1 : i32 to index
    %c0_1 = arith.constant 0 : index
    %7 = vector.load %arg3[%6, %c0_1] : memref<32x32xf32, #tpu.memory_space<vmem>>, vector<1x32xf32>
    %8 = arith.addf %5, %7 : vector<1x32xf32>
    %9 = arith.index_cast %2 : i32 to index
    %c0_2 = arith.constant 0 : index
    %10 = vector.load %arg4[%9, %c0_2] : memref<367x32xf32, #tpu.memory_space<vmem>>, vector<1x32xf32>
    %11 = arith.index_cast %3 : i32 to index
    %c0_3 = arith.constant 0 : index
    %12 = vector.load %arg5[%11, %c0_3] : memref<4x32xf32, #tpu.memory_space<vmem>>, vector<1x32xf32>
    %13 = arith.addf %10, %12 : vector<1x32xf32>
    %14 = arith.addf %8, %13 : vector<1x32xf32>
    %c0_4 = arith.constant 0 : index
    %c0_5 = arith.constant 0 : index
    %15 = vector.load %arg6[%c0_4, %c0_5] : memref<14x32xf32, #tpu.memory_space<vmem>>, vector<1x32xf32>
    tpu.vector_store %arg6[%c0_4, %c0_5], %14 {strides = array<i32>} : memref<14x32xf32, #tpu.memory_space<vmem>>, vector<1x32xf32>,
    %c4 = arith.constant 4 : index
    %16 = memref.load %arg1[%c4] : memref<56xi32, #tpu.memory_space<smem>>
    %c5 = arith.constant 5 : index
    %17 = memref.load %arg1[%c5] : memref<56xi32, #tpu.memory_space<smem>>
    %c6 = arith.constant 6 : index
    %18 = memref.load %arg1[%c6] : memref<56xi32, #tpu.memory_space<smem>>
    %c7 = arith.constant 7 : index
    %19 = memref.load %arg1[%c7] : memref<56xi32, #tpu.memory_space<smem>>
    %20 = arith.index_cast %16 : i32 to index
    %c0_6 = arith.constant 0 : index
    %21 = vector.load %arg2[%20, %c0_6] : memref<8x32xf32, #tpu.memory_space<vmem>>, vector<1x32xf32>
    %22 = arith.index_cast %17 : i32 to index
    %c0_7 = arith.constant 0 : index
    %23 = vector.load %arg3[%22, %c0_7] : memref<32x32xf32, #tpu.memory_space<vmem>>, vector<1x32xf32>
    %24 = arith.addf %21, %23 : vector<1x32xf32>
    %25 = arith.index_cast %18 : i32 to index
    %c0_8 = arith.constant 0 : index
    %26 = vector.load %arg4[%25, %c0_8] : memref<367x32xf32, #tpu.memory_space<vmem>>, vector<1x32xf32>
    %27 = arith.index_cast %19 : i32 to index
    %c0_9 = arith.constant 0 : index
    %28 = vector.load %arg5[%27, %c0_9] : memref<4x32xf32, #tpu.memory_space<vmem>>, vector<1x32xf32>
    %29 = arith.addf %26, %28 : vector<1x32xf32>
    %30 = arith.addf %24, %29 : vector<1x32xf32>
    %c1_10 = arith.constant 1 : index
    %c0_11 = arith.constant 0 : index
    %31 = vector.load %arg6[%c1_10, %c0_11] : memref<14x32xf32, #tpu.memory_space<vmem>>, vector<1x32xf32>
    tpu.vector_store %arg6[%c1_10, %c0_11], %30 {strides = array<i32>} : memref<14x32xf32, #tpu.memory_space<vmem>>, vector<1x32xf32>,
    %c8 = arith.constant 8 : index
    %32 = memref.load %arg1[%c8] : memref<56xi32, #tpu.memory_space<smem>>
    %c9 = arith.constant 9 : index
    %33 = memref.load %arg1[%c9] : memref<56xi32, #tpu.memory_space<smem>>
    %c10 = arith.constant 10 : index
    %34 = memref.load %arg1[%c10] : memref<56xi32, #tpu.memory_space<smem>>
    %c11 = arith.constant 11 : index
    %35 = memref.load %arg1[%c11] : memref<56xi32, #tpu.memory_space<smem>>
    %36 = arith.index_cast %32 : i32 to index
    %c0_12 = arith.constant 0 : index
    %37 = vector.load %arg2[%36, %c0_12] : memref<8x32xf32, #tpu.memory_space<vmem>>, vector<1x32xf32>
    %38 = arith.index_cast %33 : i32 to index
    %c0_13 = arith.constant 0 : index
    %39 = vector.load %arg3[%38, %c0_13] : memref<32x32xf32, #tpu.memory_space<vmem>>, vector<1x32xf32>
    %40 = arith.addf %37, %39 : vector<1x32xf32>
    %41 = arith.index_cast %34 : i32 to index
    %c0_14 = arith.constant 0 : index
    %42 = vector.load %arg4[%41, %c0_14] : memref<367x32xf32, #tpu.memory_space<vmem>>, vector<1x32xf32>
    %43 = arith.index_cast %35 : i32 to index
    %c0_15 = arith.constant 0 : index
    %44 = vector.load %arg5[%43, %c0_15] : memref<4x32xf32, #tpu.memory_space<vmem>>, vector<1x32xf32>
    %45 = arith.addf %42, %44 : vector<1x32xf32>
    %46 = arith.addf %40, %45 : vector<1x32xf32>
    %c2_16 = arith.constant 2 : index
    %c0_17 = arith.constant 0 : index
    %47 = vector.load %arg6[%c2_16, %c0_17] : memref<14x32xf32, #tpu.memory_space<vmem>>, vector<1x32xf32>
    tpu.vector_store %arg6[%c2_16, %c0_17], %46 {strides = array<i32>} : memref<14x32xf32, #tpu.memory_space<vmem>>, vector<1x32xf32>,
    %c12 = arith.constant 12 : index
    %48 = memref.load %arg1[%c12] : memref<56xi32, #tpu.memory_space<smem>>
    %c13 = arith.constant 13 : index
    %49 = memref.load %arg1[%c13] : memref<56xi32, #tpu.memory_space<smem>>
    %c14 = arith.constant 14 : index
    %50 = memref.load %arg1[%c14] : memref<56xi32, #tpu.memory_space<smem>>
    %c15 = arith.constant 15 : index
    %51 = memref.load %arg1[%c15] : memref<56xi32, #tpu.memory_space<smem>>
    %52 = arith.index_cast %48 : i32 to index
    %c0_18 = arith.constant 0 : index
    %53 = vector.load %arg2[%52, %c0_18] : memref<8x32xf32, #tpu.memory_space<vmem>>, vector<1x32xf32>
    %54 = arith.index_cast %49 : i32 to index
    %c0_19 = arith.constant 0 : index
    %55 = vector.load %arg3[%54, %c0_19] : memref<32x32xf32, #tpu.memory_space<vmem>>, vector<1x32xf32>
    %56 = arith.addf %53, %55 : vector<1x32xf32>
    %57 = arith.index_cast %50 : i32 to index
    %c0_20 = arith.constant 0 : index
    %58 = vector.load %arg4[%57, %c0_20] : memref<367x32xf32, #tpu.memory_space<vmem>>, vector<1x32xf32>
    %59 = arith.index_cast %51 : i32 to index
    %c0_21 = arith.constant 0 : index
    %60 = vector.load %arg5[%59, %c0_21] : memref<4x32xf32, #tpu.memory_space<vmem>>, vector<1x32xf32>
    %61 = arith.addf %58, %60 : vector<1x32xf32>
    %62 = arith.addf %56, %61 : vector<1x32xf32>
    %c3_22 = arith.constant 3 : index
    %c0_23 = arith.constant 0 : index
    %63 = vector.load %arg6[%c3_22, %c0_23] : memref<14x32xf32, #tpu.memory_space<vmem>>, vector<1x32xf32>
    tpu.vector_store %arg6[%c3_22, %c0_23], %62 {strides = array<i32>} : memref<14x32xf32, #tpu.memory_space<vmem>>, vector<1x32xf32>,
    %c16 = arith.constant 16 : index
    %64 = memref.load %arg1[%c16] : memref<56xi32, #tpu.memory_space<smem>>
    %c17 = arith.constant 17 : index
    %65 = memref.load %arg1[%c17] : memref<56xi32, #tpu.memory_space<smem>>
    %c18 = arith.constant 18 : index
    %66 = memref.load %arg1[%c18] : memref<56xi32, #tpu.memory_space<smem>>
    %c19 = arith.constant 19 : index
    %67 = memref.load %arg1[%c19] : memref<56xi32, #tpu.memory_space<smem>>
    %68 = arith.index_cast %64 : i32 to index
    %c0_24 = arith.constant 0 : index
    %69 = vector.load %arg2[%68, %c0_24] : memref<8x32xf32, #tpu.memory_space<vmem>>, vector<1x32xf32>
    %70 = arith.index_cast %65 : i32 to index
    %c0_25 = arith.constant 0 : index
    %71 = vector.load %arg3[%70, %c0_25] : memref<32x32xf32, #tpu.memory_space<vmem>>, vector<1x32xf32>
    %72 = arith.addf %69, %71 : vector<1x32xf32>
    %73 = arith.index_cast %66 : i32 to index
    %c0_26 = arith.constant 0 : index
    %74 = vector.load %arg4[%73, %c0_26] : memref<367x32xf32, #tpu.memory_space<vmem>>, vector<1x32xf32>
    %75 = arith.index_cast %67 : i32 to index
    %c0_27 = arith.constant 0 : index
    %76 = vector.load %arg5[%75, %c0_27] : memref<4x32xf32, #tpu.memory_space<vmem>>, vector<1x32xf32>
    %77 = arith.addf %74, %76 : vector<1x32xf32>
    %78 = arith.addf %72, %77 : vector<1x32xf32>
    %c4_28 = arith.constant 4 : index
    %c0_29 = arith.constant 0 : index
    %79 = vector.load %arg6[%c4_28, %c0_29] : memref<14x32xf32, #tpu.memory_space<vmem>>, vector<1x32xf32>
    tpu.vector_store %arg6[%c4_28, %c0_29], %78 {strides = array<i32>} : memref<14x32xf32, #tpu.memory_space<vmem>>, vector<1x32xf32>,
    %c20 = arith.constant 20 : index
    %80 = memref.load %arg1[%c20] : memref<56xi32, #tpu.memory_space<smem>>
    %c21 = arith.constant 21 : index
    %81 = memref.load %arg1[%c21] : memref<56xi32, #tpu.memory_space<smem>>
    %c22 = arith.constant 22 : index
    %82 = memref.load %arg1[%c22] : memref<56xi32, #tpu.memory_space<smem>>
    %c23 = arith.constant 23 : index
    %83 = memref.load %arg1[%c23] : memref<56xi32, #tpu.memory_space<smem>>
    %84 = arith.index_cast %80 : i32 to index
    %c0_30 = arith.constant 0 : index
    %85 = vector.load %arg2[%84, %c0_30] : memref<8x32xf32, #tpu.memory_space<vmem>>, vector<1x32xf32>
    %86 = arith.index_cast %81 : i32 to index
    %c0_31 = arith.constant 0 : index
    %87 = vector.load %arg3[%86, %c0_31] : memref<32x32xf32, #tpu.memory_space<vmem>>, vector<1x32xf32>
    %88 = arith.addf %85, %87 : vector<1x32xf32>
    %89 = arith.index_cast %82 : i32 to index
    %c0_32 = arith.constant 0 : index
    %90 = vector.load %arg4[%89, %c0_32] : memref<367x32xf32, #tpu.memory_space<vmem>>, vector<1x32xf32>
    %91 = arith.index_cast %83 : i32 to index
    %c0_33 = arith.constant 0 : index
    %92 = vector.load %arg5[%91, %c0_33] : memref<4x32xf32, #tpu.memory_space<vmem>>, vector<1x32xf32>
    %93 = arith.addf %90, %92 : vector<1x32xf32>
    %94 = arith.addf %88, %93 : vector<1x32xf32>
    %c5_34 = arith.constant 5 : index
    %c0_35 = arith.constant 0 : index
    %95 = vector.load %arg6[%c5_34, %c0_35] : memref<14x32xf32, #tpu.memory_space<vmem>>, vector<1x32xf32>
    tpu.vector_store %arg6[%c5_34, %c0_35], %94 {strides = array<i32>} : memref<14x32xf32, #tpu.memory_space<vmem>>, vector<1x32xf32>,
    %c24 = arith.constant 24 : index
    %96 = memref.load %arg1[%c24] : memref<56xi32, #tpu.memory_space<smem>>
    %c25 = arith.constant 25 : index
    %97 = memref.load %arg1[%c25] : memref<56xi32, #tpu.memory_space<smem>>
    %c26 = arith.constant 26 : index
    %98 = memref.load %arg1[%c26] : memref<56xi32, #tpu.memory_space<smem>>
    %c27 = arith.constant 27 : index
    %99 = memref.load %arg1[%c27] : memref<56xi32, #tpu.memory_space<smem>>
    %100 = arith.index_cast %96 : i32 to index
    %c0_36 = arith.constant 0 : index
    %101 = vector.load %arg2[%100, %c0_36] : memref<8x32xf32, #tpu.memory_space<vmem>>, vector<1x32xf32>
    %102 = arith.index_cast %97 : i32 to index
    %c0_37 = arith.constant 0 : index
    %103 = vector.load %arg3[%102, %c0_37] : memref<32x32xf32, #tpu.memory_space<vmem>>, vector<1x32xf32>
    %104 = arith.addf %101, %103 : vector<1x32xf32>
    %105 = arith.index_cast %98 : i32 to index
    %c0_38 = arith.constant 0 : index
    %106 = vector.load %arg4[%105, %c0_38] : memref<367x32xf32, #tpu.memory_space<vmem>>, vector<1x32xf32>
    %107 = arith.index_cast %99 : i32 to index
    %c0_39 = arith.constant 0 : index
    %108 = vector.load %arg5[%107, %c0_39] : memref<4x32xf32, #tpu.memory_space<vmem>>, vector<1x32xf32>
    %109 = arith.addf %106, %108 : vector<1x32xf32>
    %110 = arith.addf %104, %109 : vector<1x32xf32>
    %c6_40 = arith.constant 6 : index
    %c0_41 = arith.constant 0 : index
    %111 = vector.load %arg6[%c6_40, %c0_41] : memref<14x32xf32, #tpu.memory_space<vmem>>, vector<1x32xf32>
    tpu.vector_store %arg6[%c6_40, %c0_41], %110 {strides = array<i32>} : memref<14x32xf32, #tpu.memory_space<vmem>>, vector<1x32xf32>,
    %c28 = arith.constant 28 : index
    %112 = memref.load %arg1[%c28] : memref<56xi32, #tpu.memory_space<smem>>
    %c29 = arith.constant 29 : index
    %113 = memref.load %arg1[%c29] : memref<56xi32, #tpu.memory_space<smem>>
    %c30 = arith.constant 30 : index
    %114 = memref.load %arg1[%c30] : memref<56xi32, #tpu.memory_space<smem>>
    %c31 = arith.constant 31 : index
    %115 = memref.load %arg1[%c31] : memref<56xi32, #tpu.memory_space<smem>>
    %116 = arith.index_cast %112 : i32 to index
    %c0_42 = arith.constant 0 : index
    %117 = vector.load %arg2[%116, %c0_42] : memref<8x32xf32, #tpu.memory_space<vmem>>, vector<1x32xf32>
    %118 = arith.index_cast %113 : i32 to index
    %c0_43 = arith.constant 0 : index
    %119 = vector.load %arg3[%118, %c0_43] : memref<32x32xf32, #tpu.memory_space<vmem>>, vector<1x32xf32>
    %120 = arith.addf %117, %119 : vector<1x32xf32>
    %121 = arith.index_cast %114 : i32 to index
    %c0_44 = arith.constant 0 : index
    %122 = vector.load %arg4[%121, %c0_44] : memref<367x32xf32, #tpu.memory_space<vmem>>, vector<1x32xf32>
    %123 = arith.index_cast %115 : i32 to index
    %c0_45 = arith.constant 0 : index
    %124 = vector.load %arg5[%123, %c0_45] : memref<4x32xf32, #tpu.memory_space<vmem>>, vector<1x32xf32>
    %125 = arith.addf %122, %124 : vector<1x32xf32>
    %126 = arith.addf %120, %125 : vector<1x32xf32>
    %c7_46 = arith.constant 7 : index
    %c0_47 = arith.constant 0 : index
    %127 = vector.load %arg6[%c7_46, %c0_47] : memref<14x32xf32, #tpu.memory_space<vmem>>, vector<1x32xf32>
    tpu.vector_store %arg6[%c7_46, %c0_47], %126 {strides = array<i32>} : memref<14x32xf32, #tpu.memory_space<vmem>>, vector<1x32xf32>,
    %c32 = arith.constant 32 : index
    %128 = memref.load %arg1[%c32] : memref<56xi32, #tpu.memory_space<smem>>
    %c33 = arith.constant 33 : index
    %129 = memref.load %arg1[%c33] : memref<56xi32, #tpu.memory_space<smem>>
    %c34 = arith.constant 34 : index
    %130 = memref.load %arg1[%c34] : memref<56xi32, #tpu.memory_space<smem>>
    %c35 = arith.constant 35 : index
    %131 = memref.load %arg1[%c35] : memref<56xi32, #tpu.memory_space<smem>>
    %132 = arith.index_cast %128 : i32 to index
    %c0_48 = arith.constant 0 : index
    %133 = vector.load %arg2[%132, %c0_48] : memref<8x32xf32, #tpu.memory_space<vmem>>, vector<1x32xf32>
    %134 = arith.index_cast %129 : i32 to index
    %c0_49 = arith.constant 0 : index
    %135 = vector.load %arg3[%134, %c0_49] : memref<32x32xf32, #tpu.memory_space<vmem>>, vector<1x32xf32>
    %136 = arith.addf %133, %135 : vector<1x32xf32>
    %137 = arith.index_cast %130 : i32 to index
    %c0_50 = arith.constant 0 : index
    %138 = vector.load %arg4[%137, %c0_50] : memref<367x32xf32, #tpu.memory_space<vmem>>, vector<1x32xf32>
    %139 = arith.index_cast %131 : i32 to index
    %c0_51 = arith.constant 0 : index
    %140 = vector.load %arg5[%139, %c0_51] : memref<4x32xf32, #tpu.memory_space<vmem>>, vector<1x32xf32>
    %141 = arith.addf %138, %140 : vector<1x32xf32>
    %142 = arith.addf %136, %141 : vector<1x32xf32>
    %c8_52 = arith.constant 8 : index
    %c0_53 = arith.constant 0 : index
    %143 = vector.load %arg6[%c8_52, %c0_53] : memref<14x32xf32, #tpu.memory_space<vmem>>, vector<1x32xf32>
    tpu.vector_store %arg6[%c8_52, %c0_53], %142 {strides = array<i32>} : memref<14x32xf32, #tpu.memory_space<vmem>>, vector<1x32xf32>,
    %c36 = arith.constant 36 : index
    %144 = memref.load %arg1[%c36] : memref<56xi32, #tpu.memory_space<smem>>
    %c37 = arith.constant 37 : index
    %145 = memref.load %arg1[%c37] : memref<56xi32, #tpu.memory_space<smem>>
    %c38 = arith.constant 38 : index
    %146 = memref.load %arg1[%c38] : memref<56xi32, #tpu.memory_space<smem>>
    %c39 = arith.constant 39 : index
    %147 = memref.load %arg1[%c39] : memref<56xi32, #tpu.memory_space<smem>>
    %148 = arith.index_cast %144 : i32 to index
    %c0_54 = arith.constant 0 : index
    %149 = vector.load %arg2[%148, %c0_54] : memref<8x32xf32, #tpu.memory_space<vmem>>, vector<1x32xf32>
    %150 = arith.index_cast %145 : i32 to index
    %c0_55 = arith.constant 0 : index
    %151 = vector.load %arg3[%150, %c0_55] : memref<32x32xf32, #tpu.memory_space<vmem>>, vector<1x32xf32>
    %152 = arith.addf %149, %151 : vector<1x32xf32>
    %153 = arith.index_cast %146 : i32 to index
    %c0_56 = arith.constant 0 : index
    %154 = vector.load %arg4[%153, %c0_56] : memref<367x32xf32, #tpu.memory_space<vmem>>, vector<1x32xf32>
    %155 = arith.index_cast %147 : i32 to index
    %c0_57 = arith.constant 0 : index
    %156 = vector.load %arg5[%155, %c0_57] : memref<4x32xf32, #tpu.memory_space<vmem>>, vector<1x32xf32>
    %157 = arith.addf %154, %156 : vector<1x32xf32>
    %158 = arith.addf %152, %157 : vector<1x32xf32>
    %c9_58 = arith.constant 9 : index
    %c0_59 = arith.constant 0 : index
    %159 = vector.load %arg6[%c9_58, %c0_59] : memref<14x32xf32, #tpu.memory_space<vmem>>, vector<1x32xf32>
    tpu.vector_store %arg6[%c9_58, %c0_59], %158 {strides = array<i32>} : memref<14x32xf32, #tpu.memory_space<vmem>>, vector<1x32xf32>,
    %c40 = arith.constant 40 : index
    %160 = memref.load %arg1[%c40] : memref<56xi32, #tpu.memory_space<smem>>
    %c41 = arith.constant 41 : index
    %161 = memref.load %arg1[%c41] : memref<56xi32, #tpu.memory_space<smem>>
    %c42 = arith.constant 42 : index
    %162 = memref.load %arg1[%c42] : memref<56xi32, #tpu.memory_space<smem>>
    %c43 = arith.constant 43 : index
    %163 = memref.load %arg1[%c43] : memref<56xi32, #tpu.memory_space<smem>>
    %164 = arith.index_cast %160 : i32 to index
    %c0_60 = arith.constant 0 : index
    %165 = vector.load %arg2[%164, %c0_60] : memref<8x32xf32, #tpu.memory_space<vmem>>, vector<1x32xf32>
    %166 = arith.index_cast %161 : i32 to index
    %c0_61 = arith.constant 0 : index
    %167 = vector.load %arg3[%166, %c0_61] : memref<32x32xf32, #tpu.memory_space<vmem>>, vector<1x32xf32>
    %168 = arith.addf %165, %167 : vector<1x32xf32>
    %169 = arith.index_cast %162 : i32 to index
    %c0_62 = arith.constant 0 : index
    %170 = vector.load %arg4[%169, %c0_62] : memref<367x32xf32, #tpu.memory_space<vmem>>, vector<1x32xf32>
    %171 = arith.index_cast %163 : i32 to index
    %c0_63 = arith.constant 0 : index
    %172 = vector.load %arg5[%171, %c0_63] : memref<4x32xf32, #tpu.memory_space<vmem>>, vector<1x32xf32>
    %173 = arith.addf %170, %172 : vector<1x32xf32>
    %174 = arith.addf %168, %173 : vector<1x32xf32>
    %c10_64 = arith.constant 10 : index
    %c0_65 = arith.constant 0 : index
    %175 = vector.load %arg6[%c10_64, %c0_65] : memref<14x32xf32, #tpu.memory_space<vmem>>, vector<1x32xf32>
    tpu.vector_store %arg6[%c10_64, %c0_65], %174 {strides = array<i32>} : memref<14x32xf32, #tpu.memory_space<vmem>>, vector<1x32xf32>,
    %c44 = arith.constant 44 : index
    %176 = memref.load %arg1[%c44] : memref<56xi32, #tpu.memory_space<smem>>
    %c45 = arith.constant 45 : index
    %177 = memref.load %arg1[%c45] : memref<56xi32, #tpu.memory_space<smem>>
    %c46 = arith.constant 46 : index
    %178 = memref.load %arg1[%c46] : memref<56xi32, #tpu.memory_space<smem>>
    %c47 = arith.constant 47 : index
    %179 = memref.load %arg1[%c47] : memref<56xi32, #tpu.memory_space<smem>>
    %180 = arith.index_cast %176 : i32 to index
    %c0_66 = arith.constant 0 : index
    %181 = vector.load %arg2[%180, %c0_66] : memref<8x32xf32, #tpu.memory_space<vmem>>, vector<1x32xf32>
    %182 = arith.index_cast %177 : i32 to index
    %c0_67 = arith.constant 0 : index
    %183 = vector.load %arg3[%182, %c0_67] : memref<32x32xf32, #tpu.memory_space<vmem>>, vector<1x32xf32>
    %184 = arith.addf %181, %183 : vector<1x32xf32>
    %185 = arith.index_cast %178 : i32 to index
    %c0_68 = arith.constant 0 : index
    %186 = vector.load %arg4[%185, %c0_68] : memref<367x32xf32, #tpu.memory_space<vmem>>, vector<1x32xf32>
    %187 = arith.index_cast %179 : i32 to index
    %c0_69 = arith.constant 0 : index
    %188 = vector.load %arg5[%187, %c0_69] : memref<4x32xf32, #tpu.memory_space<vmem>>, vector<1x32xf32>
    %189 = arith.addf %186, %188 : vector<1x32xf32>
    %190 = arith.addf %184, %189 : vector<1x32xf32>
    %c11_70 = arith.constant 11 : index
    %c0_71 = arith.constant 0 : index
    %191 = vector.load %arg6[%c11_70, %c0_71] : memref<14x32xf32, #tpu.memory_space<vmem>>, vector<1x32xf32>
    tpu.vector_store %arg6[%c11_70, %c0_71], %190 {strides = array<i32>} : memref<14x32xf32, #tpu.memory_space<vmem>>, vector<1x32xf32>,
    %c48 = arith.constant 48 : index
    %192 = memref.load %arg1[%c48] : memref<56xi32, #tpu.memory_space<smem>>
    %c49 = arith.constant 49 : index
    %193 = memref.load %arg1[%c49] : memref<56xi32, #tpu.memory_space<smem>>
    %c50 = arith.constant 50 : index
    %194 = memref.load %arg1[%c50] : memref<56xi32, #tpu.memory_space<smem>>
    %c51 = arith.constant 51 : index
    %195 = memref.load %arg1[%c51] : memref<56xi32, #tpu.memory_space<smem>>
    %196 = arith.index_cast %192 : i32 to index
    %c0_72 = arith.constant 0 : index
    %197 = vector.load %arg2[%196, %c0_72] : memref<8x32xf32, #tpu.memory_space<vmem>>, vector<1x32xf32>
    %198 = arith.index_cast %193 : i32 to index
    %c0_73 = arith.constant 0 : index
    %199 = vector.load %arg3[%198, %c0_73] : memref<32x32xf32, #tpu.memory_space<vmem>>, vector<1x32xf32>
    %200 = arith.addf %197, %199 : vector<1x32xf32>
    %201 = arith.index_cast %194 : i32 to index
    %c0_74 = arith.constant 0 : index
    %202 = vector.load %arg4[%201, %c0_74] : memref<367x32xf32, #tpu.memory_space<vmem>>, vector<1x32xf32>
    %203 = arith.index_cast %195 : i32 to index
    %c0_75 = arith.constant 0 : index
    %204 = vector.load %arg5[%203, %c0_75] : memref<4x32xf32, #tpu.memory_space<vmem>>, vector<1x32xf32>
    %205 = arith.addf %202, %204 : vector<1x32xf32>
    %206 = arith.addf %200, %205 : vector<1x32xf32>
    %c12_76 = arith.constant 12 : index
    %c0_77 = arith.constant 0 : index
    %207 = vector.load %arg6[%c12_76, %c0_77] : memref<14x32xf32, #tpu.memory_space<vmem>>, vector<1x32xf32>
    tpu.vector_store %arg6[%c12_76, %c0_77], %206 {strides = array<i32>} : memref<14x32xf32, #tpu.memory_space<vmem>>, vector<1x32xf32>,
    %c52 = arith.constant 52 : index
    %208 = memref.load %arg1[%c52] : memref<56xi32, #tpu.memory_space<smem>>
    %c53 = arith.constant 53 : index
    %209 = memref.load %arg1[%c53] : memref<56xi32, #tpu.memory_space<smem>>
    %c54 = arith.constant 54 : index
    %210 = memref.load %arg1[%c54] : memref<56xi32, #tpu.memory_space<smem>>
    %c55 = arith.constant 55 : index
    %211 = memref.load %arg1[%c55] : memref<56xi32, #tpu.memory_space<smem>>
    %212 = arith.index_cast %208 : i32 to index
    %c0_78 = arith.constant 0 : index
    %213 = vector.load %arg2[%212, %c0_78] : memref<8x32xf32, #tpu.memory_space<vmem>>, vector<1x32xf32>
    %214 = arith.index_cast %209 : i32 to index
    %c0_79 = arith.constant 0 : index
    %215 = vector.load %arg3[%214, %c0_79] : memref<32x32xf32, #tpu.memory_space<vmem>>, vector<1x32xf32>
    %216 = arith.addf %213, %215 : vector<1x32xf32>
    %217 = arith.index_cast %210 : i32 to index
    %c0_80 = arith.constant 0 : index
    %218 = vector.load %arg4[%217, %c0_80] : memref<367x32xf32, #tpu.memory_space<vmem>>, vector<1x32xf32>
    %219 = arith.index_cast %211 : i32 to index
    %c0_81 = arith.constant 0 : index
    %220 = vector.load %arg5[%219, %c0_81] : memref<4x32xf32, #tpu.memory_space<vmem>>, vector<1x32xf32>
    %221 = arith.addf %218, %220 : vector<1x32xf32>
    %222 = arith.addf %216, %221 : vector<1x32xf32>
    %c13_82 = arith.constant 13 : index
    %c0_83 = arith.constant 0 : index
    %223 = vector.load %arg6[%c13_82, %c0_83] : memref<14x32xf32, #tpu.memory_space<vmem>>, vector<1x32xf32>
    tpu.vector_store %arg6[%c13_82, %c0_83], %222 {strides = array<i32>} : memref<14x32xf32, #tpu.memory_space<vmem>>, vector<1x32xf32>,
    return
  }
  func.func @transform_0(%arg0: i32, %arg1: memref<56xi32, #tpu.memory_space<smem>>) -> (i32, i32) {
    %c0_i32 = arith.constant 0 : i32
    %c0_i32_0 = arith.constant 0 : i32
    %c0_i32_1 = arith.constant 0 : i32
    return %c0_i32, %c0_i32_0 : i32, i32
  }
  func.func @transform_1(%arg0: i32, %arg1: memref<56xi32, #tpu.memory_space<smem>>) -> (i32, i32) {
    %c0_i32 = arith.constant 0 : i32
    %c0_i32_0 = arith.constant 0 : i32
    %c0_i32_1 = arith.constant 0 : i32
    return %c0_i32, %c0_i32_0 : i32, i32
  }
  func.func @transform_2(%arg0: i32, %arg1: memref<56xi32, #tpu.memory_space<smem>>) -> (i32, i32) {
    %c0_i32 = arith.constant 0 : i32
    %c0_i32_0 = arith.constant 0 : i32
    %c0_i32_1 = arith.constant 0 : i32
    return %c0_i32, %c0_i32_0 : i32, i32
  }
  func.func @transform_3(%arg0: i32, %arg1: memref<56xi32, #tpu.memory_space<smem>>) -> (i32, i32) {
    %c0_i32 = arith.constant 0 : i32
    %c0_i32_0 = arith.constant 0 : i32
    %c0_i32_1 = arith.constant 0 : i32
    return %c0_i32, %c0_i32_0 : i32, i32
  }
  func.func @transform_4(%arg0: i32, %arg1: memref<56xi32, #tpu.memory_space<smem>>) -> (i32, i32) {
    %c0_i32 = arith.constant 0 : i32
    %c0_i32_0 = arith.constant 0 : i32
    %c0_i32_1 = arith.constant 0 : i32
    return %c0_i32, %c0_i32_0 : i32, i32
  }
}

</mosaic_0001>

<llo_original>
// kernel: tpu_custom_call.1
$region0: #{tpu_custom_call.1}
  #allocation0 [shape = 'u32[]', space=smem, size = 0x4, offset = 0x4, fixed_abs, tag = 'smem constant byte address 0x4 - core index']
  #allocation1 [shape = 'u32[144,128]{1,0:T(1,128)}', space=vmem, size = 0x12000, scoped, tag = 'internal scratch']
  #allocation2 [shape = 's32[1]{0}', space=sflag, size = 0x4, scoped, tag = 'scoped memory for tpu_custom_call.1']
  #allocation3 [shape = 'u8[512]{0}', space=smem, size = 0x200, scoped, tag = 'prefetched SMEM operand 0']
  %s0 = inlined_call_operand.vmem [shape: s32[56], index: 0, kind: input, shape index: {}]
  %s1 = inlined_call_operand.vmem [shape: f32[8,32], index: 1, kind: input, shape index: {}]
  %s2 = inlined_call_operand.vmem [shape: f32[32,32], index: 2, kind: input, shape index: {}]
  %s3 = inlined_call_operand.vmem [shape: f32[367,32], index: 3, kind: input, shape index: {}]
  %s4 = inlined_call_operand.vmem [shape: f32[4,32], index: 4, kind: input, shape index: {}]
  %s5 = inlined_call_operand.hbm [shape: f32[14,32], index: 5, kind: output, shape index: {}]
  %s6 = sld [smem:[#allocation0]]
  $region26: #{tpu_custom_call.1} parent=0
    _
  %s8 = ssub.s32 1, %s6
  %s9 = scalar_select 0, %s8, %s6
  %s10 = sshll.u32 %s0, 4
  %s11 = int_to_ptr.vmem [resolvable:$true] %s10
  %13 = dma.vmem_to_smem %s11, 16, [#allocation3], [#allocation2]
  %14 = dma.done [#allocation2], 16
  %15 = sfence
  $region1: #{tpu_custom_call.1} parent=0
    #allocation4 [shape = 'u8[8192]{0}', space=vmem, size = 0x2000, scoped, tag = 'output window, operand 0, single buffered']
    #allocation5 [shape = 's32[1]{0}', space=sflag, size = 0x4, scoped, tag = 'scoped memory for tpu_custom_call.1']
    %16 = vsyncpa [#allocation5], 0
    // Predicated region
    $region2: #{tpu_custom_call.1} parent=1 // pred_check
      _
    $region3: #{tpu_custom_call.1} parent=1 // pred_check_branch
      %18 = sbr.rel (0) target = $region5
    $region4: #{tpu_custom_call.1} parent=1 // pred_region
      _
    $region5: #{tpu_custom_call.1} parent=1 // pred_fallthru
      _
    // Predicated region
    $region6: #{tpu_custom_call.1} parent=1 // pred_check
      _
    $region7: #{tpu_custom_call.1} parent=1 // pred_check_branch
      %20 = sbr.rel (0) target = $region9
    $region8: #{tpu_custom_call.1} parent=1 // pred_region
      _
    $region9: #{tpu_custom_call.1} parent=1 // pred_fallthru
      _
    // Predicated region
    $region10: #{tpu_custom_call.1} parent=1 // pred_check
      _
    $region11: #{tpu_custom_call.1} parent=1 // pred_check_branch
      %22 = sbr.rel (0) target = $region13
    $region12: #{tpu_custom_call.1} parent=1 // pred_region
      _
    $region13: #{tpu_custom_call.1} parent=1 // pred_fallthru
      _
    // Predicated region
    $region14: #{tpu_custom_call.1} parent=1 // pred_check
      _
    $region15: #{tpu_custom_call.1} parent=1 // pred_check_branch
      %24 = sbr.rel (0) target = $region17
    $region16: #{tpu_custom_call.1} parent=1 // pred_region
      _
    $region17: #{tpu_custom_call.1} parent=1 // pred_fallthru
      _
    %s25 = sld [smem:[#allocation3]]
    %s26 = sld [smem:[#allocation3 + $0x1]]
    %s27 = sld [smem:[#allocation3 + $0x2]]
    %s28 = sld [smem:[#allocation3 + $0x3]]
    %s29 = scalar_lea.vmem %s1, %s25
    %v30 = vld [vmem:[%s29] sm:$0x1]
    %s31 = scalar_lea.vmem %s2, %s26
    %v32 = vld [vmem:[%s31] sm:$0x1]
    %v33 = vadd.f32 %v30, %v32
    %s34 = scalar_lea.vmem %s3, %s27
    %v35 = vld [vmem:[%s34] sm:$0x1]
    %s36 = scalar_lea.vmem %s4, %s28
    %v37 = vld [vmem:[%s36] sm:$0x1]
    %v38 = vadd.f32 %v35, %v37
    %v39 = vadd.f32 %v33, %v38
    %vm40 = vcmask 253952
    %41 = vst.msk [vmem:[#allocation4] sm:$0x1] %vm40, %v39
    %s42 = sld [smem:[#allocation3 + $0x4]]
    %s43 = sld [smem:[#allocation3 + $0x5]]
    %s44 = sld [smem:[#allocation3 + $0x6]]
    %s45 = sld [smem:[#allocation3 + $0x7]]
    %s46 = scalar_lea.vmem %s1, %s42
    %v47 = vld [vmem:[%s46] sm:$0x1]
    %s48 = scalar_lea.vmem %s2, %s43
    %v49 = vld [vmem:[%s48] sm:$0x1]
    %v50 = vadd.f32 %v47, %v49
    %s51 = scalar_lea.vmem %s3, %s44
    %v52 = vld [vmem:[%s51] sm:$0x1]
    %s53 = scalar_lea.vmem %s4, %s45
    %v54 = vld [vmem:[%s53] sm:$0x1]
    %v55 = vadd.f32 %v52, %v54
    %v56 = vadd.f32 %v50, %v55
    %57 = vst.msk [vmem:[#allocation4 + $0x1] sm:$0x1] %vm40, %v56
    %s58 = sld [smem:[#allocation3 + $0x8]]
    %s59 = sld [smem:[#allocation3 + $0x9]]
    %s60 = sld [smem:[#allocation3 + $0xa]]
    %s61 = sld [smem:[#allocation3 + $0xb]]
    %s62 = scalar_lea.vmem %s1, %s58
    %v63 = vld [vmem:[%s62] sm:$0x1]
    %s64 = scalar_lea.vmem %s2, %s59
    %v65 = vld [vmem:[%s64] sm:$0x1]
    %v66 = vadd.f32 %v63, %v65
    %s67 = scalar_lea.vmem %s3, %s60
    %v68 = vld [vmem:[%s67] sm:$0x1]
    %s69 = scalar_lea.vmem %s4, %s61
    %v70 = vld [vmem:[%s69] sm:$0x1]
    %v71 = vadd.f32 %v68, %v70
    %v72 = vadd.f32 %v66, %v71
    %73 = vst.msk [vmem:[#allocation4 + $0x2] sm:$0x1] %vm40, %v72
    %s74 = sld [smem:[#allocation3 + $0xc]]
    %s75 = sld [smem:[#allocation3 + $0xd]]
    %s76 = sld [smem:[#allocation3 + $0xe]]
    %s77 = sld [smem:[#allocation3 + $0xf]]
    %s78 = scalar_lea.vmem %s1, %s74
    %v79 = vld [vmem:[%s78] sm:$0x1]
    %s80 = scalar_lea.vmem %s2, %s75
    %v81 = vld [vmem:[%s80] sm:$0x1]
    %v82 = vadd.f32 %v79, %v81
    %s83 = scalar_lea.vmem %s3, %s76
    %v84 = vld [vmem:[%s83] sm:$0x1]
    %s85 = scalar_lea.vmem %s4, %s77
    %v86 = vld [vmem:[%s85] sm:$0x1]
    %v87 = vadd.f32 %v84, %v86
    %v88 = vadd.f32 %v82, %v87
    %89 = vst.msk [vmem:[#allocation4 + $0x3] sm:$0x1] %vm40, %v88
    %s90 = sld [smem:[#allocation3 + $0x10]]
    %s91 = sld [smem:[#allocation3 + $0x11]]
    %s92 = sld [smem:[#allocation3 + $0x12]]
    %s93 = sld [smem:[#allocation3 + $0x13]]
    %s94 = scalar_lea.vmem %s1, %s90
    %v95 = vld [vmem:[%s94] sm:$0x1]
    %s96 = scalar_lea.vmem %s2, %s91
    %v97 = vld [vmem:[%s96] sm:$0x1]
    %v98 = vadd.f32 %v95, %v97
    %s99 = scalar_lea.vmem %s3, %s92
    %v100 = vld [vmem:[%s99] sm:$0x1]
    %s101 = scalar_lea.vmem %s4, %s93
    %v102 = vld [vmem:[%s101] sm:$0x1]
    %v103 = vadd.f32 %v100, %v102
    %v104 = vadd.f32 %v98, %v103
    %105 = vst.msk [vmem:[#allocation4 + $0x4] sm:$0x1] %vm40, %v104
    %s106 = sld [smem:[#allocation3 + $0x14]]
    %s107 = sld [smem:[#allocation3 + $0x15]]
    %s108 = sld [smem:[#allocation3 + $0x16]]
    %s109 = sld [smem:[#allocation3 + $0x17]]
    %s110 = scalar_lea.vmem %s1, %s106
    %v111 = vld [vmem:[%s110] sm:$0x1]
    %s112 = scalar_lea.vmem %s2, %s107
    %v113 = vld [vmem:[%s112] sm:$0x1]
    %v114 = vadd.f32 %v111, %v113
    %s115 = scalar_lea.vmem %s3, %s108
    %v116 = vld [vmem:[%s115] sm:$0x1]
    %s117 = scalar_lea.vmem %s4, %s109
    %v118 = vld [vmem:[%s117] sm:$0x1]
    %v119 = vadd.f32 %v116, %v118
    %v120 = vadd.f32 %v114, %v119
    %121 = vst.msk [vmem:[#allocation4 + $0x5] sm:$0x1] %vm40, %v120
    %s122 = sld [smem:[#allocation3 + $0x18]]
    %s123 = sld [smem:[#allocation3 + $0x19]]
    %s124 = sld [smem:[#allocation3 + $0x1a]]
    %s125 = sld [smem:[#allocation3 + $0x1b]]
    %s126 = scalar_lea.vmem %s1, %s122
    %v127 = vld [vmem:[%s126] sm:$0x1]
    %s128 = scalar_lea.vmem %s2, %s123
    %v129 = vld [vmem:[%s128] sm:$0x1]
    %v130 = vadd.f32 %v127, %v129
    %s131 = scalar_lea.vmem %s3, %s124
    %v132 = vld [vmem:[%s131] sm:$0x1]
    %s133 = scalar_lea.vmem %s4, %s125
    %v134 = vld [vmem:[%s133] sm:$0x1]
    %v135 = vadd.f32 %v132, %v134
    %v136 = vadd.f32 %v130, %v135
    %137 = vst.msk [vmem:[#allocation4 + $0x6] sm:$0x1] %vm40, %v136
    %s138 = sld [smem:[#allocation3 + $0x1c]]
    %s139 = sld [smem:[#allocation3 + $0x1d]]
    %s140 = sld [smem:[#allocation3 + $0x1e]]
    %s141 = sld [smem:[#allocation3 + $0x1f]]
    %s142 = scalar_lea.vmem %s1, %s138
    %v143 = vld [vmem:[%s142] sm:$0x1]
    %s144 = scalar_lea.vmem %s2, %s139
    %v145 = vld [vmem:[%s144] sm:$0x1]
    %v146 = vadd.f32 %v143, %v145
    %s147 = scalar_lea.vmem %s3, %s140
    %v148 = vld [vmem:[%s147] sm:$0x1]
    %s149 = scalar_lea.vmem %s4, %s141
    %v150 = vld [vmem:[%s149] sm:$0x1]
    %v151 = vadd.f32 %v148, %v150
    %v152 = vadd.f32 %v146, %v151
    %153 = vst.msk [vmem:[#allocation4 + $0x7] sm:$0x1] %vm40, %v152
    %s154 = sld [smem:[#allocation3 + $0x20]]
    %s155 = sld [smem:[#allocation3 + $0x21]]
    %s156 = sld [smem:[#allocation3 + $0x22]]
    %s157 = sld [smem:[#allocation3 + $0x23]]
    %s158 = scalar_lea.vmem %s1, %s154
    %v159 = vld [vmem:[%s158] sm:$0x1]
    %s160 = scalar_lea.vmem %s2, %s155
    %v161 = vld [vmem:[%s160] sm:$0x1]
    %v162 = vadd.f32 %v159, %v161
    %s163 = scalar_lea.vmem %s3, %s156
    %v164 = vld [vmem:[%s163] sm:$0x1]
    %s165 = scalar_lea.vmem %s4, %s157
    %v166 = vld [vmem:[%s165] sm:$0x1]
    %v167 = vadd.f32 %v164, %v166
    %v168 = vadd.f32 %v162, %v167
    %169 = vst.msk [vmem:[#allocation4 + $0x8] sm:$0x1] %vm40, %v168
    %s170 = sld [smem:[#allocation3 + $0x24]]
    %s171 = sld [smem:[#allocation3 + $0x25]]
    %s172 = sld [smem:[#allocation3 + $0x26]]
    %s173 = sld [smem:[#allocation3 + $0x27]]
    %s174 = scalar_lea.vmem %s1, %s170
    %v175 = vld [vmem:[%s174] sm:$0x1]
    %s176 = scalar_lea.vmem %s2, %s171
    %v177 = vld [vmem:[%s176] sm:$0x1]
    %v178 = vadd.f32 %v175, %v177
    %s179 = scalar_lea.vmem %s3, %s172
    %v180 = vld [vmem:[%s179] sm:$0x1]
    %s181 = scalar_lea.vmem %s4, %s173
    %v182 = vld [vmem:[%s181] sm:$0x1]
    %v183 = vadd.f32 %v180, %v182
    %v184 = vadd.f32 %v178, %v183
    %185 = vst.msk [vmem:[#allocation4 + $0x9] sm:$0x1] %vm40, %v184
    %s186 = sld [smem:[#allocation3 + $0x28]]
    %s187 = sld [smem:[#allocation3 + $0x29]]
    %s188 = sld [smem:[#allocation3 + $0x2a]]
    %s189 = sld [smem:[#allocation3 + $0x2b]]
    %s190 = scalar_lea.vmem %s1, %s186
    %v191 = vld [vmem:[%s190] sm:$0x1]
    %s192 = scalar_lea.vmem %s2, %s187
    %v193 = vld [vmem:[%s192] sm:$0x1]
    %v194 = vadd.f32 %v191, %v193
    %s195 = scalar_lea.vmem %s3, %s188
    %v196 = vld [vmem:[%s195] sm:$0x1]
    %s197 = scalar_lea.vmem %s4, %s189
    %v198 = vld [vmem:[%s197] sm:$0x1]
    %v199 = vadd.f32 %v196, %v198
    %v200 = vadd.f32 %v194, %v199
    %201 = vst.msk [vmem:[#allocation4 + $0xa] sm:$0x1] %vm40, %v200
    %s202 = sld [smem:[#allocation3 + $0x2c]]
    %s203 = sld [smem:[#allocation3 + $0x2d]]
    %s204 = sld [smem:[#allocation3 + $0x2e]]
    %s205 = sld [smem:[#allocation3 + $0x2f]]
    %s206 = scalar_lea.vmem %s1, %s202
    %v207 = vld [vmem:[%s206] sm:$0x1]
    %s208 = scalar_lea.vmem %s2, %s203
    %v209 = vld [vmem:[%s208] sm:$0x1]
    %v210 = vadd.f32 %v207, %v209
    %s211 = scalar_lea.vmem %s3, %s204
    %v212 = vld [vmem:[%s211] sm:$0x1]
    %s213 = scalar_lea.vmem %s4, %s205
    %v214 = vld [vmem:[%s213] sm:$0x1]
    %v215 = vadd.f32 %v212, %v214
    %v216 = vadd.f32 %v210, %v215
    %217 = vst.msk [vmem:[#allocation4 + $0xb] sm:$0x1] %vm40, %v216
    %s218 = sld [smem:[#allocation3 + $0x30]]
    %s219 = sld [smem:[#allocation3 + $0x31]]
    %s220 = sld [smem:[#allocation3 + $0x32]]
    %s221 = sld [smem:[#allocation3 + $0x33]]
    %s222 = scalar_lea.vmem %s1, %s218
    %v223 = vld [vmem:[%s222] sm:$0x1]
    %s224 = scalar_lea.vmem %s2, %s219
    %v225 = vld [vmem:[%s224] sm:$0x1]
    %v226 = vadd.f32 %v223, %v225
    %s227 = scalar_lea.vmem %s3, %s220
    %v228 = vld [vmem:[%s227] sm:$0x1]
    %s229 = scalar_lea.vmem %s4, %s221
    %v230 = vld [vmem:[%s229] sm:$0x1]
    %v231 = vadd.f32 %v228, %v230
    %v232 = vadd.f32 %v226, %v231
    %233 = vst.msk [vmem:[#allocation4 + $0xc] sm:$0x1] %vm40, %v232
    %s234 = sld [smem:[#allocation3 + $0x34]]
    %s235 = sld [smem:[#allocation3 + $0x35]]
    %s236 = sld [smem:[#allocation3 + $0x36]]
    %s237 = sld [smem:[#allocation3 + $0x37]]
    %s238 = scalar_lea.vmem %s1, %s234
    %v239 = vld [vmem:[%s238] sm:$0x1]
    %s240 = scalar_lea.vmem %s2, %s235
    %v241 = vld [vmem:[%s240] sm:$0x1]
    %v242 = vadd.f32 %v239, %v241
    %s243 = scalar_lea.vmem %s3, %s236
    %v244 = vld [vmem:[%s243] sm:$0x1]
    %s245 = scalar_lea.vmem %s4, %s237
    %v246 = vld [vmem:[%s245] sm:$0x1]
    %v247 = vadd.f32 %v244, %v246
    %v248 = vadd.f32 %v242, %v247
    %249 = vst.msk [vmem:[#allocation4 + $0xd] sm:$0x1] %vm40, %v248
    // Predicated region
    $region18: #{tpu_custom_call.1} parent=1 // pred_check
      _
    $region19: #{tpu_custom_call.1} parent=1 // pred_check_branch
      %251 = sbr.rel (0) target = $region21
    $region20: #{tpu_custom_call.1} parent=1 // pred_region
      %s253 = ssub.s32 256, 256
      %254 = vsyncadd [#allocation5], %s253
      %s255 = sshll.u32 [#allocation4], 4
      %s256 = int_to_ptr.vmem [resolvable:$true] %s255
      %261 = dma.vmem_to_hbm [thread:$0]  %s256, 256, %s5, [#allocation5], 128, 128, 8
    $region21: #{tpu_custom_call.1} parent=1 // pred_fallthru
      _
    // Predicated region
    $region22: #{tpu_custom_call.1} parent=1 // pred_check
      _
    $region23: #{tpu_custom_call.1} parent=1 // pred_check_branch
      %263 = sbr.rel (0) target = $region25
    $region24: #{tpu_custom_call.1} parent=1 // pred_region
      %264 = dma.done [#allocation5], 256
    $region25: #{tpu_custom_call.1} parent=1 // pred_fallthru
      _
    %265 = vsyncpa [#allocation5], 1

</llo_original>
